<compile_context>
chip_gen: v6e
topology: v6e:2x2x1
jax: 0.10.0
libtpu: 0.0.40
codegen_flags: <defaults>
</compile_context>

<pallas_src>
import functools

import jax
import jax.numpy as jnp
from jax import lax
from jax.experimental import pallas as pl
from jax.experimental.pallas import tpu as pltpu


def _cdiv(a, b):
    return -(-a // b)


def _round_up(x, m):
    return _cdiv(x, m) * m


def _ce_kernel(logits_ref, targets_ref, out_ref, acc_ref, *,
               total_n, tile_rows, tiles_per_split):
    """Accumulate per-row NLL for this split; emit the split's partial sum at the end."""
    s = pl.program_id(0)                  # split index (parallel across TCs on v7x)
    i = pl.program_id(1)                  # row-tile index within the split (reduction axis)

    @pl.when(i == 0)
    def _():
        acc_ref[...] = jnp.zeros_like(acc_ref)

    x = logits_ref[...].astype(jnp.float32)           # (TR, C): f32 math, any input dtype
    t = targets_ref[...]                              # (TR, 1) int32

    # numerically stable log-sum-exp per row (row-wise ops only -> garbage rows stay local)
    m = jnp.max(x, axis=-1, keepdims=True)
    lse = m + jnp.log(jnp.sum(jnp.exp(x - m), axis=-1, keepdims=True))        # (TR, 1)

    # target-logit gather via broadcasted one-hot compare (no dynamic gather on vector path)
    cls_ids = lax.broadcasted_iota(jnp.int32, (1, x.shape[-1]), 1)            # (1, C)
    tgt_logit = jnp.sum(jnp.where(cls_ids == t, x, 0.0),
                        axis=-1, keepdims=True)                               # (TR, 1)

    # mask rows that fall past the true N (partial last tile, or tiles clamped by the
    # index_map of an over-provisioned split) so they contribute exactly 0
    row_ids = lax.broadcasted_iota(jnp.int32, (tile_rows, 1), 0)
    global_row = (s * tiles_per_split + i) * tile_rows + row_ids
    valid = global_row < total_n

    # per-row accumulation only (VPU, hidden under HBM DMA); cross-row reduce at the end
    acc_ref[...] = acc_ref[...] + jnp.where(valid, lse - tgt_logit, 0.0)

    @pl.when(i == pl.num_programs(1) - 1)
    def _():
        partial = jnp.sum(acc_ref[...])
        out_ref[...] = jnp.broadcast_to(partial, out_ref.shape).astype(out_ref.dtype)


def _pick_tile_rows(c_pad, itemsize, n, num_splits):
    """Largest row tile (multiple of 16, <=2048) that double-buffers comfortably in VMEM."""
    try:
        vmem_bytes = pltpu.get_tpu_info().vmem_capacity_bytes
    except Exception:
        vmem_bytes = 64 << 20             # conservative: v7x physical VMEM
    budget = vmem_bytes // 4              # headroom for double buffers + scratch + outputs
    # 2x-buffered logits row + 2x-buffered lane-padded target row + per-row f32 accumulator
    bytes_per_row = 2 * (c_pad * itemsize + 128 * 4) + 128 * 4
    tr = budget // bytes_per_row
    tr = max(16, min(2048, (tr // 16) * 16))
    needed = max(16, _round_up(_cdiv(n, num_splits), 16))   # don't over-size tiny problems
    return int(min(tr, needed))


def majority_loss(logits, targets, *, num_splits=2):
    """Equivalent of MajorityLoss.forward: F.cross_entropy(logits.view(-1, C), targets.view(-1))."""
    c = logits.shape[-1]
    x = logits.reshape(-1, c)                         # keep native dtype (bf16 stays bf16 in HBM)
    t = targets.reshape(-1, 1).astype(jnp.int32)
    n = x.shape[0]
    # TODO(synk): no ignore_index / class-weight handling (PyTorch defaults not used here).
    # TODO(synk): vocab-scale C would want a second class-axis grid with an online LSE;
    #             not needed for the class counts exercised here.

    c_pad = _round_up(c, 128)
    tile_rows = _pick_tile_rows(c_pad, x.dtype.itemsize, n, num_splits)
    total_tiles = _cdiv(n, tile_rows)                 # real row tiles (last one may be partial)
    tiles_per_split = _cdiv(total_tiles, num_splits)
    last_tile = total_tiles - 1

    kernel = functools.partial(_ce_kernel, total_n=n, tile_rows=tile_rows,
                               tiles_per_split=tiles_per_split)

    # Clamp to the last real tile: excess iterations of the final split re-read an in-bounds
    # tile (no extra DMA thanks to block-index revisiting) and are fully masked in-kernel.
    def row_map(s, i):
        return (jnp.minimum(s * tiles_per_split + i, last_tile), 0)

    # explicit VMEM budget: 2x-buffered input tiles + output tiles + per-row acc + headroom
    logits_tile_b = tile_rows * c_pad * x.dtype.itemsize
    targets_tile_b = tile_rows * 128 * 4
    vmem_limit = int(2 * (logits_tile_b + targets_tile_b)
                     + 2 * (8 * 128 * 4)
                     + tile_rows * 128 * 4
                     + (2 << 20))
    vmem_limit = max(8 << 20, min(vmem_limit, 100 << 20))

    out = pl.pallas_call(
        kernel,
        out_shape=jax.ShapeDtypeStruct((num_splits * 8, 128), jnp.float32),
        grid_spec=pltpu.PrefetchScalarGridSpec(
            num_scalar_prefetch=0,
            grid=(num_splits, tiles_per_split),
            in_specs=[
                pl.BlockSpec((tile_rows, c), row_map),
                pl.BlockSpec((tile_rows, 1), row_map),
            ],
            out_specs=pl.BlockSpec((8, 128), lambda s, i: (s, 0)),
            scratch_shapes=[pltpu.VMEM((tile_rows, 1), jnp.float32)],
        ),
        compiler_params=pltpu.CompilerParams(
            dimension_semantics=("parallel", "arbitrary"),
            vmem_limit_bytes=vmem_limit,
        ),
    )(x, t)

    partials = out[0::8, 0]                           # one partial sum per split
    return jnp.sum(partials) / jnp.float32(n)


def _reference_loss(logits, targets):
    c = logits.shape[-1]
    x = logits.reshape(-1, c).astype(jnp.float32)
    t = targets.reshape(-1).astype(jnp.int32)
    logp = jax.nn.log_softmax(x, axis=-1)
    nll = -jnp.take_along_axis(logp, t[:, None], axis=-1)[:, 0]
    return jnp.mean(nll)


if __name__ == "__main__":
    key = jax.random.PRNGKey(0)

    # test 1: f32, batch=2, seq=8 patches, num_classes=16 -> flattened N=16 rows
    k1, k2, k3, k4, k5, k6 = jax.random.split(key, 6)
    logits1 = jax.random.normal(k1, (2, 8, 16), dtype=jnp.float32)
    targets1 = jax.random.randint(k2, (2, 8), 0, 16, dtype=jnp.int32)
    loss1 = jax.block_until_ready(majority_loss(logits1, targets1))
    ref1 = jax.block_until_ready(_reference_loss(logits1, targets1))
    assert jnp.allclose(loss1, ref1, rtol=1e-5, atol=1e-5), (loss1, ref1)

    # test 2: f32, ragged N (=14) exercises the partial-tile masking path (no host padding)
    logits2 = jax.random.normal(k3, (2, 7, 20), dtype=jnp.float32)
    targets2 = jax.random.randint(k4, (2, 7), 0, 20, dtype=jnp.int32)
    loss2 = jax.block_until_ready(majority_loss(logits2, targets2))
    ref2 = jax.block_until_ready(_reference_loss(logits2, targets2))
    assert jnp.allclose(loss2, ref2, rtol=1e-5, atol=1e-5), (loss2, ref2)

    # test 3: bf16 logits stay bf16 in HBM (upcast to f32 inside the kernel)
    logits3 = jax.random.normal(k5, (2, 8, 32), dtype=jnp.bfloat16)
    targets3 = jax.random.randint(k6, (2, 8), 0, 32, dtype=jnp.int32)
    loss3 = jax.block_until_ready(majority_loss(logits3, targets3))
    ref3 = jax.block_until_ready(_reference_loss(logits3, targets3))
    assert jnp.allclose(loss3, ref3, rtol=1e-3, atol=1e-3), (loss3, ref3)

    print("KERNEL_OK")
</pallas_src>

<mosaic_0001>
module attributes {stable_mosaic.version = 11 : i64} {
  func.func @_ce_kernel(%arg0: i32, %arg1: i32, %arg2: memref<16x16xf32, #tpu.memory_space<vmem>>, %arg3: memref<16x1xi32, #tpu.memory_space<vmem>>, %arg4: memref<8x128xf32, #tpu.memory_space<vmem>>, %arg5: memref<16x1xf32, #tpu.memory_space<vmem>>) attributes {dimension_semantics = [#tpu.dimension_semantics<parallel>, #tpu.dimension_semantics<arbitrary>], iteration_bounds = array<i64: 2, 1>, scalar_prefetch = 0 : i64, scratch_operands = 1 : i64, tpu.core_type = #tpu.core_type<tc>, window_params = [{transform_indices = @transform_0, window_bounds = array<i64: 16, 16>}, {transform_indices = @transform_1, window_bounds = array<i64: 16, 1>}, {transform_indices = @transform_2, window_bounds = array<i64: 8, 128>}]} {
    %c0_i32 = arith.constant 0 : i32
    %0 = arith.cmpi eq, %arg1, %c0_i32 : i32
    %1 = arith.extui %0 : i1 to i32
    %c0_i32_0 = arith.constant 0 : i32
    %2 = arith.cmpi ne, %1, %c0_i32_0 : i32
    scf.if %2 {
      %cst_15 = arith.constant 0.000000e+00 : f32
      %39 = vector.broadcast %cst_15 : f32 to vector<16x1xf32>
      %c0_16 = arith.constant 0 : index
      %c0_17 = arith.constant 0 : index
      %40 = vector.load %arg5[%c0_16, %c0_17] : memref<16x1xf32, #tpu.memory_space<vmem>>, vector<16x1xf32>
      tpu.vector_store %arg5[%c0_16, %c0_17], %39 {strides = array<i32>} : memref<16x1xf32, #tpu.memory_space<vmem>>, vector<16x1xf32>,
    } else {
    }
    %c0 = arith.constant 0 : index
    %c0_1 = arith.constant 0 : index
    %3 = vector.load %arg2[%c0, %c0_1] : memref<16x16xf32, #tpu.memory_space<vmem>>, vector<16x16xf32>
    %c0_2 = arith.constant 0 : index
    %c0_3 = arith.constant 0 : index
    %4 = vector.load %arg3[%c0_2, %c0_3] : memref<16x1xi32, #tpu.memory_space<vmem>>, vector<16x1xi32>
    %cst = arith.constant dense<0xFF800000> : vector<16xf32>
    %5 = vector.multi_reduction <maximumf>, %3, %cst [1] : vector<16x16xf32> to vector<16xf32>
    %6 = vector.shape_cast %5 : vector<16xf32> to vector<16x1xf32>
    %7 = vector.broadcast %6 : vector<16x1xf32> to vector<16x16xf32>
    %8 = arith.subf %3, %7 : vector<16x16xf32>
    %9 = math.exp %8 : vector<16x16xf32>
    %cst_4 = arith.constant dense<0.000000e+00> : vector<16xf32>
    %10 = vector.multi_reduction <add>, %9, %cst_4 [1] : vector<16x16xf32> to vector<16xf32>
    %11 = vector.shape_cast %10 : vector<16xf32> to vector<16x1xf32>
    %12 = math.log %11 : vector<16x1xf32>
    %13 = arith.addf %6, %12 : vector<16x1xf32>
    %14 = tpu.iota {dimensions = array<i32: 1>} : vector<1x16xi32>
    %15 = vector.broadcast %14 : vector<1x16xi32> to vector<16x16xi32>
    %16 = vector.broadcast %4 : vector<16x1xi32> to vector<16x16xi32>
    %17 = arith.cmpi eq, %15, %16 : vector<16x16xi32>
    %cst_5 = arith.constant 0.000000e+00 : f32
    %18 = vector.broadcast %cst_5 : f32 to vector<16x16xf32>
    %19 = arith.select %17, %3, %18 : vector<16x16xi1>, vector<16x16xf32>
    %cst_6 = arith.constant dense<0.000000e+00> : vector<16xf32>
    %20 = vector.multi_reduction <add>, %19, %cst_6 [1] : vector<16x16xf32> to vector<16xf32>
    %21 = vector.shape_cast %20 : vector<16xf32> to vector<16x1xf32>
    %22 = tpu.iota {dimensions = array<i32: 0>} : vector<16x1xi32>
    %c1_i32 = arith.constant 1 : i32
    %23 = arith.muli %arg0, %c1_i32 : i32
    %24 = arith.addi %23, %arg1 : i32
    %c16_i32 = arith.constant 16 : i32
    %25 = arith.muli %24, %c16_i32 : i32
    %26 = vector.broadcast %25 : i32 to vector<16x1xi32>
    %27 = arith.addi %26, %22 : vector<16x1xi32>
    %c16_i32_7 = arith.constant 16 : i32
    %28 = vector.broadcast %c16_i32_7 : i32 to vector<16x1xi32>
    %29 = arith.cmpi slt, %27, %28 : vector<16x1xi32>
    %c0_8 = arith.constant 0 : index
    %c0_9 = arith.constant 0 : index
    %30 = vector.load %arg5[%c0_8, %c0_9] : memref<16x1xf32, #tpu.memory_space<vmem>>, vector<16x1xf32>
    %31 = arith.subf %13, %21 : vector<16x1xf32>
    %cst_10 = arith.constant 0.000000e+00 : f32
    %32 = vector.broadcast %cst_10 : f32 to vector<16x1xf32>
    %33 = arith.select %29, %31, %32 : vector<16x1xi1>, vector<16x1xf32>
    %34 = arith.addf %30, %33 : vector<16x1xf32>
    %c0_11 = arith.constant 0 : index
    %c0_12 = arith.constant 0 : index
    %35 = vector.load %arg5[%c0_11, %c0_12] : memref<16x1xf32, #tpu.memory_space<vmem>>, vector<16x1xf32>
    tpu.vector_store %arg5[%c0_11, %c0_12], %34 {strides = array<i32>} : memref<16x1xf32, #tpu.memory_space<vmem>>, vector<16x1xf32>,
    %c0_i32_13 = arith.constant 0 : i32
    %36 = arith.cmpi eq, %arg1, %c0_i32_13 : i32
    %37 = arith.extui %36 : i1 to i32
    %c0_i32_14 = arith.constant 0 : i32
    %38 = arith.cmpi ne, %37, %c0_i32_14 : i32
    scf.if %38 {
      %c0_15 = arith.constant 0 : index
      %c0_16 = arith.constant 0 : index
      %39 = vector.load %arg5[%c0_15, %c0_16] : memref<16x1xf32, #tpu.memory_space<vmem>>, vector<16x1xf32>
      %40 = vector.shape_cast %39 : vector<16x1xf32> to vector<1x16x1xf32>
      %cst_17 = arith.constant dense<0.000000e+00> : vector<1xf32>
      %41 = vector.multi_reduction <add>, %40, %cst_17 [1, 2] : vector<1x16x1xf32> to vector<1xf32>
      %42 = vector.shape_cast %41 : vector<1xf32> to vector<1x1x1xf32>
      %43 = vector.extract %42[0, 0, 0] : f32 from vector<1x1x1xf32>
      %44 = vector.broadcast %43 : f32 to vector<8x128xf32>
      %c0_18 = arith.constant 0 : index
      %c0_19 = arith.constant 0 : index
      %45 = vector.load %arg4[%c0_18, %c0_19] : memref<8x128xf32, #tpu.memory_space<vmem>>, vector<8x128xf32>
      tpu.vector_store %arg4[%c0_18, %c0_19], %44 {strides = array<i32>} : memref<8x128xf32, #tpu.memory_space<vmem>>, vector<8x128xf32>,
    } else {
    }
    return
  }
  func.func @transform_0(%arg0: i32, %arg1: i32) -> (i32, i32) {
    %c1_i32 = arith.constant 1 : i32
    %0 = arith.muli %arg0, %c1_i32 : i32
    %1 = arith.addi %0, %arg1 : i32
    %c0_i32 = arith.constant 0 : i32
    %2 = arith.minsi %1, %c0_i32 : i32
    %c0_i32_0 = arith.constant 0 : i32
    %c0_i32_1 = arith.constant 0 : i32
    return %2, %c0_i32_0 : i32, i32
  }
  func.func @transform_1(%arg0: i32, %arg1: i32) -> (i32, i32) {
    %c1_i32 = arith.constant 1 : i32
    %0 = arith.muli %arg0, %c1_i32 : i32
    %1 = arith.addi %0, %arg1 : i32
    %c0_i32 = arith.constant 0 : i32
    %2 = arith.minsi %1, %c0_i32 : i32
    %c0_i32_0 = arith.constant 0 : i32
    %c0_i32_1 = arith.constant 0 : i32
    return %2, %c0_i32_0 : i32, i32
  }
  func.func @transform_2(%arg0: i32, %arg1: i32) -> (i32, i32) {
    %c0_i32 = arith.constant 0 : i32
    %c0_i32_0 = arith.constant 0 : i32
    return %arg0, %c0_i32 : i32, i32
  }
}

</mosaic_0001>

<llo_original>
// kernel: tpu_custom_call.1
$region0: #{tpu_custom_call.1}
  #allocation0 [shape = 'u32[]', space=smem, size = 0x4, offset = 0x4, fixed_abs, tag = 'smem constant byte address 0x4 - core index']
  #allocation1 [shape = 'u32[144,128]{1,0:T(1,128)}', space=vmem, size = 0x12000, scoped, tag = 'internal scratch']
  #allocation2 [shape = 'f32[16,1]{1,0:T(8,128)}', space=vmem, size = 0x2000, scoped, tag = 'scratch operand']
  %s0 = inlined_call_operand.vmem [shape: f32[16,16], index: 0, kind: input, shape index: {}]
  %s1 = inlined_call_operand.vmem [shape: s32[16,1], index: 1, kind: input, shape index: {}]
  %s2 = inlined_call_operand.hbm [shape: f32[16,128], index: 2, kind: output, shape index: {}]
  %s3 = sld [smem:[#allocation0]]
  $region49: #{tpu_custom_call.1} parent=0
    _
  %s5 = ssub.s32 1, %s3
  %s6 = scalar_select 0, %s5, %s3
  $region1: #{tpu_custom_call.1} parent=0
    #allocation3 [shape = 'u8[8192]{0}', space=vmem, size = 0x2000, scoped, tag = 'output window, operand 0']
    #allocation4 [shape = 's32[2]{0}', space=sflag, size = 0x8, scoped, tag = 'scoped memory for tpu_custom_call.1']
    %7 = vsyncpa [#allocation4], 0
    %s8 = scalar_lea.sflag [#allocation4], 1
    %9 = vsyncpa %s8, 0
    loop: start=0, step=1, limit=4
    $region2: #{tpu_custom_call.1} parent=1 // loop_pre_header
      _
    $region3: #{tpu_custom_call.1} parent=1 // loop_header
      %s11 = sphi 0, %s15
      %p12 = scmp.ge.s32.totalorder %s11, 4
      %s18 = sphi 0, %s30
      %s19 = sphi 0, %s26
      %s20 = sphi 0, %s18
      %s21 = sphi 0, %s19
      %s22 = sphi 0, %s20
      %s23 = sphi 0, %s21
      %s39 = sphi 0, %s41
      %s42 = sphi 0, %s39
      %s43 = sphi 0, %s42
      %s59 = sphi 0, %s43
      %s71 = sphi 0, %s73
      %s74 = sphi 0, %s71
      %s75 = sphi 0, %s74
      %s91 = sphi 0, %s75
      %s97 = sphi 0, %s99
      %s100 = sphi 0, %s97
      %s101 = sphi 0, %s100
      %s117 = sphi 0, %s101
    $region4: #{tpu_custom_call.1} parent=1 // loop_header_branch
      %14 = sbr.rel (%p12) target = $region8
    $region5: #{tpu_custom_call.1} parent=1 // loop_body
      %s16 = ssub.s32 %s11, 1
      %s17 = ssub.s32 %s11, 2
      %s24 = sadd.s32 1, %s19
      %p25 = scmp.ge.s32.totalorder %s24, 1
      %s26 = scalar_select %p25, 0, %s24
      %s27 = sadd.s32 1, %s18
      %s28 = scalar_select %p25, %s27, %s18
      %p29 = scmp.ge.s32.totalorder %s28, 2
      %s30 = scalar_select %p29, 0, %s28
      %s31 = sadd.s32 %s18, %s19
      %p32 = scmp.lt.s32.totalorder %s31, 0
      %s33 = scalar_select %p32, %s31, 0
      %s34 = sadd.s32 %s30, %s26
      %p35 = scmp.lt.s32.totalorder %s34, 0
      %s36 = scalar_select %p35, %s34, 0
      %s37 = ssub.s32 %s33, %s36
      %p38 = scmp.eq.s32.totalorder %s37, 0
      %s40 = sadd.s32 %s39, 1
      %s41 = scalar_select %p38, %s39, %s40
      %p44 = pneg %p38
      %p45 = scmp.eq.s32.totalorder %s11, 1
      %p46 = por %p44, %p45
      %p47 = scmp.ne.s32.totalorder %s39, %s42
      %p48 = scmp.eq.s32.totalorder %s11, 0
      %p49 = por %p47, %p48
      %p50 = scmp.ne.s32.totalorder %s39, %s42
      %p51 = scmp.eq.s32.totalorder %s16, 1
      %p52 = por %p50, %p51
      %p53 = scmp.ne.s32.totalorder %s42, %s43
      %p54 = scmp.eq.s32.totalorder %s16, 0
      %p55 = por %p53, %p54
      %p56 = scmp.ne.s32.totalorder %s42, %s43
      %p57 = scmp.eq.s32.totalorder %s17, 1
      %p58 = por %p56, %p57
      %p60 = scmp.ne.s32.totalorder %s43, %s59
      %p61 = scmp.eq.s32.totalorder %s17, 0
      %p62 = por %p60, %p61
      %s63 = sadd.s32 %s18, %s19
      %p64 = scmp.lt.s32.totalorder %s63, 0
      %s65 = scalar_select %p64, %s63, 0
      %s66 = sadd.s32 %s30, %s26
      %p67 = scmp.lt.s32.totalorder %s66, 0
      %s68 = scalar_select %p67, %s66, 0
      %s69 = ssub.s32 %s65, %s68
      %p70 = scmp.eq.s32.totalorder %s69, 0
      %s72 = sadd.s32 %s71, 1
      %s73 = scalar_select %p70, %s71, %s72
      %p76 = pneg %p70
      %p77 = scmp.eq.s32.totalorder %s11, 1
      %p78 = por %p76, %p77
      %p79 = scmp.ne.s32.totalorder %s71, %s74
      %p80 = scmp.eq.s32.totalorder %s11, 0
      %p81 = por %p79, %p80
      %p82 = scmp.ne.s32.totalorder %s71, %s74
      %p83 = scmp.eq.s32.totalorder %s16, 1
      %p84 = por %p82, %p83
      %p85 = scmp.ne.s32.totalorder %s74, %s75
      %p86 = scmp.eq.s32.totalorder %s16, 0
      %p87 = por %p85, %p86
      %p88 = scmp.ne.s32.totalorder %s74, %s75
      %p89 = scmp.eq.s32.totalorder %s17, 1
      %p90 = por %p88, %p89
      %p92 = scmp.ne.s32.totalorder %s75, %s91
      %p93 = scmp.eq.s32.totalorder %s17, 0
      %p94 = por %p92, %p93
      %s95 = ssub.s32 %s18, %s30
      %p96 = scmp.eq.s32.totalorder %s95, 0
      %s98 = sadd.s32 %s97, 1
      %s99 = scalar_select %p96, %s97, %s98
      %p102 = pneg %p96
      %p103 = scmp.eq.s32.totalorder %s11, 1
      %p104 = por %p102, %p103
      %p105 = scmp.ne.s32.totalorder %s97, %s100
      %p106 = scmp.eq.s32.totalorder %s11, 0
      %p107 = por %p105, %p106
      %p108 = scmp.ne.s32.totalorder %s97, %s100
      %p109 = scmp.eq.s32.totalorder %s16, 1
      %p110 = por %p108, %p109
      %p111 = scmp.ne.s32.totalorder %s100, %s101
      %p112 = scmp.eq.s32.totalorder %s16, 0
      %p113 = por %p111, %p112
      %p114 = scmp.ne.s32.totalorder %s100, %s101
      %p115 = scmp.eq.s32.totalorder %s17, 1
      %p116 = por %p114, %p115
      %p118 = scmp.ne.s32.totalorder %s101, %s117
      %p119 = scmp.eq.s32.totalorder %s17, 0
      %p120 = por %p118, %p119
      %p121 = scmp.le.s32.totalorder 1, %s11
      %p122 = scmp.lt.s32.totalorder %s11, 3
      %p123 = pnand %p121, %p122
      %p124 = pneg %p123
      // Predicated region
      $region9: #{tpu_custom_call.1} parent=5 // pred_check
        _
      $region10: #{tpu_custom_call.1} parent=5 // pred_check_branch
        %126 = sbr.rel (%p123) target = $region12
      $region11: #{tpu_custom_call.1} parent=5 // pred_region
        %s127 = ssub.s32 %s11, 1
      $region12: #{tpu_custom_call.1} parent=5 // pred_fallthru
        _
      %p128 = scmp.lt.s32.totalorder %s11, 2
      // Predicated region
      $region13: #{tpu_custom_call.1} parent=5 // pred_check
        %p129 = pneg %p128
      $region14: #{tpu_custom_call.1} parent=5 // pred_check_branch
        %131 = sbr.rel (%p129) target = $region16
      $region15: #{tpu_custom_call.1} parent=5 // pred_region
        // Predicated region
        $region17: #{tpu_custom_call.1} parent=15 // pred_check
          %p132 = pneg %p49
        $region18: #{tpu_custom_call.1} parent=15 // pred_check_branch
          %134 = sbr.rel (%p132) target = $region20
        $region19: #{tpu_custom_call.1} parent=15 // pred_region
          %s135 = sadd.s32 %s18, %s19
          %p136 = scmp.lt.s32.totalorder %s135, 0
          %s137 = scalar_select %p136, %s135, 0
          %s138 = smul.u32 2, %s137
          %p139 = scmp.lt.s32.totalorder %s138, 1
          %s140 = scalar_select %p139, %s138, 1
          %s141 = smul.addr %s140, 8
          %s142 = scalar_lea.vmem %s0, %s141
          %s143 = sadd.s32 %s18, %s19
          %p144 = scmp.lt.s32.totalorder %s143, 0
          %s145 = scalar_select %p144, %s143, 0
          %s146 = smul.u32 2, %s145
        $region20: #{tpu_custom_call.1} parent=15 // pred_fallthru
          _
        // Predicated region
        $region21: #{tpu_custom_call.1} parent=15 // pred_check
          %p147 = pneg %p81
        $region22: #{tpu_custom_call.1} parent=15 // pred_check_branch
          %149 = sbr.rel (%p147) target = $region24
        $region23: #{tpu_custom_call.1} parent=15 // pred_region
          %s150 = sadd.s32 %s18, %s19
          %p151 = scmp.lt.s32.totalorder %s150, 0
          %s152 = scalar_select %p151, %s150, 0
          %s153 = smul.u32 2, %s152
          %p154 = scmp.lt.s32.totalorder %s153, 1
          %s155 = scalar_select %p154, %s153, 1
          %s156 = smul.addr %s155, 8
          %s157 = scalar_lea.vmem %s1, %s156
          %s158 = sadd.s32 %s18, %s19
          %p159 = scmp.lt.s32.totalorder %s158, 0
          %s160 = scalar_select %p159, %s158, 0
          %s161 = smul.u32 2, %s160
        $region24: #{tpu_custom_call.1} parent=15 // pred_fallthru
          _
      $region16: #{tpu_custom_call.1} parent=5 // pred_fallthru
        _
      %p162 = scmp.le.s32.totalorder 1, %s11
      %p163 = scmp.lt.s32.totalorder %s11, 3
      %p164 = pnand %p162, %p163
      %p165 = pneg %p164
      // Predicated region
      $region25: #{tpu_custom_call.1} parent=5 // pred_check
        _
      $region26: #{tpu_custom_call.1} parent=5 // pred_check_branch
        %167 = sbr.rel (%p164) target = $region28
      $region27: #{tpu_custom_call.1} parent=5 // pred_region
        %s168 = ssub.s32 %s11, 1
        %s169 = sadd.s32 %s20, %s21
        %p170 = scmp.lt.s32.totalorder %s169, 0
        %s171 = scalar_select %p170, %s169, 0
        %s172 = smul.u32 2, %s171
        %p173 = scmp.lt.s32.totalorder %s172, 1
        %s174 = scalar_select %p173, %s172, 1
        %s175 = smul.addr %s174, 8
        %s176 = scalar_lea.vmem %s0, %s175
        %p177 = pneg %p55
        %p178 = pneg %p52
        %s179 = sadd.s32 %s20, %s21
        %p180 = scmp.lt.s32.totalorder %s179, 0
        %s181 = scalar_select %p180, %s179, 0
        %s182 = smul.u32 2, %s181
        %p183 = scmp.lt.s32.totalorder %s182, 1
        %s184 = scalar_select %p183, %s182, 1
        %s185 = smul.addr %s184, 8
        %s186 = scalar_lea.vmem %s1, %s185
        %p187 = pneg %p87
        %p188 = pneg %p84
        %p189 = pneg %p113
        %p190 = pneg %p110
        %s191 = sand.u32 %s100, 1
        %s192 = scalar_lea.sflag [#allocation4], %s191
        %s193 = sand.u32 %s100, 1
        %s194 = smul.addr %s193, 8
        %s195 = scalar_lea.vmem [#allocation3], %s194
        %s196 = sadd.s32 %s20, %s21
        %p197 = scmp.lt.s32.totalorder %s196, 0
        %s198 = scalar_select %p197, %s196, 0
        %s199 = smul.u32 2, %s198
        %p200 = scmp.lt.s32.totalorder %s199, 1
        %s201 = scalar_select %p200, %s199, 1
        %s202 = smul.addr %s201, 8
        %s203 = scalar_lea.vmem %s0, %s202
        %s204 = sadd.s32 %s20, %s21
        %p205 = scmp.lt.s32.totalorder %s204, 0
        %s206 = scalar_select %p205, %s204, 0
        %s207 = smul.u32 2, %s206
        %s208 = sadd.s32 %s20, %s21
        %p209 = scmp.lt.s32.totalorder %s208, 0
        %s210 = scalar_select %p209, %s208, 0
        %s211 = smul.u32 2, %s210
        %p212 = scmp.lt.s32.totalorder %s211, 1
        %s213 = scalar_select %p212, %s211, 1
        %s214 = smul.addr %s213, 8
        %s215 = scalar_lea.vmem %s1, %s214
        %s216 = sadd.s32 %s20, %s21
        %p217 = scmp.lt.s32.totalorder %s216, 0
        %s218 = scalar_select %p217, %s216, 0
        %s219 = smul.u32 2, %s218
        %p220 = scmp.eq.s32.totalorder %s21, 0
        // Predicated region
        $region29: #{tpu_custom_call.1} parent=27 // pred_check
          %p221 = pneg %p220
        $region30: #{tpu_custom_call.1} parent=27 // pred_check_branch
          %223 = sbr.rel (%p221) target = $region32
        $region31: #{tpu_custom_call.1} parent=27 // pred_region
          %vm224 = vcmask 7168
          %225 = vst.msk [vmem:[#allocation2] sm:$0xff] %vm224, 0.0
          %226 = vst.msk [vmem:[#allocation2 + $0x8] sm:$0xff] %vm224, 0.0
        $region32: #{tpu_custom_call.1} parent=27 // pred_fallthru
          _
        %v227 = vld [vmem:[%s203] sm:$0xff]
        %v228 = vld [vmem:[%s203 + $0x8] sm:$0xff]
        %v229 = vld [vmem:[%s215] sm:$0xff]
        %v230 = vld [vmem:[%s215 + $0x8] sm:$0xff]
        %vm231 = vcmask 130048
        %v232 = vsel %vm231, %v227, -inf
        %233 = vmax.xlane.f32.xlu0 %v232
        %v234 = vpop.xlane.xlu0 %233
        %v235 = vsel %vm231, %v228, -inf
        %236 = vmax.xlane.f32.xlu0 %v235
        %v237 = vpop.xlane.xlu0 %236
        %v238 = vsub.f32 %v227, %v234
        %v239 = vsub.f32 %v228, %v237
        %v240 = vmul.f32 %v238, 1.442695
        %v241 = vpow.pop %v240
        %v242 = vmul.f32 %v239, 1.442695
        %v243 = vpow.pop %v242
        %v244 = vsel %vm231, %v241, 0.0
        %245 = vadd.xlane.f32.xlu0 %v244
        %v246 = vpop.xlane.xlu0 %245
        %v247 = vsel %vm231, %v243, 0.0
        %248 = vadd.xlane.f32.xlu0 %v247
        %v249 = vpop.xlane.xlu0 %248
        %v250 = vlog2.pop %v246
        %v251 = vmul.f32 %v250, 0.6931472
        %v252 = vlog2.pop %v249
        %v253 = vmul.f32 %v252, 0.6931472
        %v254 = vadd.f32 %v234, %v251
        %v255 = vadd.f32 %v237, %v253
        %v256 = vlaneseq
        %v257 = vand.u32 %v256, 127
        %258 = vset.pattern.permute.xlu0 0
        %259 = vperm.xlu0 %258, %v229
        %v260 = vpop.permute.xlu0 %259
        %261 = vset.pattern.permute.xlu0 0
        %262 = vperm.xlu0 %261, %v230
        %v263 = vpop.permute.xlu0 %262
        %vm264 = vcmp.eq.s32.totalorder %v257, %v260
        %vm265 = vcmp.eq.s32.totalorder %v257, %v263
        %v266 = vsel %vm264, %v227, 0.0
        %v267 = vsel %vm265, %v228, 0.0
        %v268 = vsel %vm231, %v266, 0.0
        %269 = vadd.xlane.f32.xlu0 %v268
        %v270 = vpop.xlane.xlu0 %269
        %v271 = vsel %vm231, %v267, 0.0
        %272 = vadd.xlane.f32.xlu0 %v271
        %v273 = vpop.xlane.xlu0 %272
        %v274 = vlaneseq
        %v275 = vshrl.u32 %v274, 7
        %v276 = vadd.s32 %v275, 8
        %s277 = sadd.s32 %s20, %s21
        %s278 = smul.u32 %s277, 16
        %v279 = vstv %s278
        %v280 = vadd.s32 %v279, %v275
        %v281 = vadd.s32 %v279, %v276
        %vm282 = vcmp.lt.s32.totalorder %v280, 16
        %vm283 = vcmp.lt.s32.totalorder %v281, 16
        %v284 = vld [vmem:[#allocation2] sm:$0xff]
        %v285 = vld [vmem:[#allocation2 + $0x8] sm:$0xff]
        %v286 = vsub.f32 %v254, %v270
        %v287 = vsub.f32 %v255, %v273
        %v288 = vsel %vm282, %v286, 0.0
        %v289 = vsel %vm283, %v287, 0.0
        %v290 = vadd.f32 %v284, %v288
        %v291 = vadd.f32 %v285, %v289
        %vm292 = vcmask 7168
        %293 = vst.msk [vmem:[#allocation2] sm:$0xff] %vm292, %v290
        %294 = vst.msk [vmem:[#allocation2 + $0x8] sm:$0xff] %vm292, %v291
        // Predicated region
        $region33: #{tpu_custom_call.1} parent=27 // pred_check
          %p295 = pneg %p220
        $region34: #{tpu_custom_call.1} parent=27 // pred_check_branch
          %297 = sbr.rel (%p295) target = $region36
        $region35: #{tpu_custom_call.1} parent=27 // pred_region
          %v298 = vld [vmem:[#allocation2] sm:$0xff]
          %v299 = vld [vmem:[#allocation2 + $0x8] sm:$0xff]
          %v300 = vsel %vm292, %v298, 0.0
          %v301 = vsel %vm292, %v299, 0.0
          %v302 = vadd.f32 %v300, %v301
          %303 = vadd.xlane.f32.xlu0 %v302
          %v304 = vpop.xlane.xlu0 %303
          %v305 = vrot.slane %v304, 4
          %v306 = vadd.f32 %v304, %v305
          %v307 = vrot.slane %v306, 2
          %v308 = vadd.f32 %v306, %v307
          %v309 = vrot.slane %v308, 1
          %v310 = vadd.f32 %v308, %v309
          %s311 = vtos %v310
          %v312 = vstv %s311
          %313 = vst [vmem:[%s195] sm:$0xff] %v312
        $region36: #{tpu_custom_call.1} parent=27 // pred_fallthru
          _
        %s314 = sand.u32 %s100, 1
        %s315 = scalar_lea.sflag [#allocation4], %s314
        %s316 = sand.u32 %s100, 1
        %s317 = smul.addr %s316, 8
        %s318 = scalar_lea.vmem [#allocation3], %s317
        // Predicated region
        $region37: #{tpu_custom_call.1} parent=27 // pred_check
          %p319 = pneg %p110
        $region38: #{tpu_custom_call.1} parent=27 // pred_check_branch
          %321 = sbr.rel (%p319) target = $region40
        $region39: #{tpu_custom_call.1} parent=27 // pred_region
          %s323 = ssub.s32 128, 128
          %324 = vsyncadd %s315, %s323
          %s325 = smul.addr %s20, 128
          %s326 = scalar_lea.hbm %s2, %s325
          %s328 = sshll.u32 %s318, 4
          %s329 = int_to_ptr.vmem [resolvable:$true] %s328
          %331 = dma.vmem_to_hbm [thread:$0]  %s329, 128, %s326, %s315
        $region40: #{tpu_custom_call.1} parent=27 // pred_fallthru
          _
      $region28: #{tpu_custom_call.1} parent=5 // pred_fallthru
        _
      %p332 = scmp.le.s32.totalorder 2, %s11
      // Predicated region
      $region41: #{tpu_custom_call.1} parent=5 // pred_check
        %p333 = pneg %p332
      $region42: #{tpu_custom_call.1} parent=5 // pred_check_branch
        %335 = sbr.rel (%p333) target = $region44
      $region43: #{tpu_custom_call.1} parent=5 // pred_region
        %s336 = ssub.s32 %s11, 2
        // Predicated region
        $region45: #{tpu_custom_call.1} parent=43 // pred_check
          %p337 = pneg %p116
        $region46: #{tpu_custom_call.1} parent=43 // pred_check_branch
          %339 = sbr.rel (%p337) target = $region48
        $region47: #{tpu_custom_call.1} parent=43 // pred_region
          %s340 = sand.u32 %s101, 1
          %s341 = scalar_lea.sflag [#allocation4], %s340
          %s342 = sand.u32 %s101, 1
          %s343 = smul.addr %s342, 8
          %s344 = scalar_lea.vmem [#allocation3], %s343
          %345 = dma.done %s341, 128
        $region48: #{tpu_custom_call.1} parent=43 // pred_fallthru
          _
      $region44: #{tpu_custom_call.1} parent=5 // pred_fallthru
        _
    $region6: #{tpu_custom_call.1} parent=1 // loop_footer
      %s15 = sadd.s32 1, %s11
    $region7: #{tpu_custom_call.1} parent=1 // loop_footer_branch
      %10 = sbr.rel target = $region3
    $region8: #{tpu_custom_call.1} parent=1 // loop_exit
      _
    %346 = vsyncpa [#allocation4], 1
    %s347 = scalar_lea.sflag [#allocation4], 1
    %348 = vsyncpa %s347, 1

</llo_original>
